<compile_context>
chip_gen: v6e
topology: v6e:2x2x1
jax: 0.10.0
libtpu: 0.0.40
codegen_flags: <defaults>
</compile_context>

<pallas_src>
import functools

import jax
import jax.numpy as jnp
from jax.experimental import pallas as pl
from jax.experimental.pallas import tpu as pltpu

LANE = 128          # lane-axis alignment for weight/output feature dims
TB_ALIGN = 16       # batch-tile alignment (bf16 output sublane packing)
NEG_BIG = -1e30     # f32 bias fill for padded logit columns -> softmax prob 0


def _round_up(x, m):
    return ((x + m - 1) // m) * m


def decision_net_kernel(x_ref, w1_ref, b1_ref, w2_ref, b2_ref, w3_ref, b3_ref,
                        o_ref):
    # x block: (TB, in_dim) f32 straight from HBM; cast to bf16 for the MXU.
    x = x_ref[...].astype(jnp.bfloat16)

    # fc1 + ReLU (bf16 matmul operands, f32 accumulate / epilogue)
    h1 = jnp.dot(x, w1_ref[...], preferred_element_type=jnp.float32) + b1_ref[...]
    h1 = jnp.maximum(h1, 0.0).astype(jnp.bfloat16)

    # fc2 + ReLU
    h2 = jnp.dot(h1, w2_ref[...], preferred_element_type=jnp.float32) + b2_ref[...]
    h2 = jnp.maximum(h2, 0.0).astype(jnp.bfloat16)

    # fc3 (padded columns carry bias NEG_BIG in f32 -> exp underflows to 0)
    logits = jnp.dot(h2, w3_ref[...], preferred_element_type=jnp.float32) + b3_ref[...]

    # softmax over the feature (lane) axis == PyTorch Softmax(dim=1) on 2-D x.
    # Exact divide so rows sum to 1 (approx reciprocal previously broke this).
    m = jnp.max(logits, axis=-1, keepdims=True)
    e = jnp.exp(logits - m)
    denom = jnp.sum(e, axis=-1, keepdims=True)
    o_ref[...] = (e / denom).astype(o_ref.dtype)


def prepare_params(params):
    """One-time prep: transpose to [in, out], pad out-dims to 128, bf16 weights.

    w1 keeps its true in_dim rows (no K padding) so x can be read un-padded.
    """
    hid_dim, in_dim = params["w1"].shape
    out_dim = params["w3"].shape[0]

    hid_p = _round_up(hid_dim, LANE)
    out_p = _round_up(out_dim, LANE)

    def pad_w(w_t, rows, cols):
        w = jnp.zeros((rows, cols), jnp.bfloat16)
        return w.at[: w_t.shape[0], : w_t.shape[1]].set(w_t.astype(jnp.bfloat16))

    def pad_b(b, cols, fill=0.0):
        bp = jnp.full((1, cols), fill, jnp.float32)
        return bp.at[0, : b.shape[0]].set(b.astype(jnp.float32))

    return {
        "w1": pad_w(params["w1"].T, in_dim, hid_p),   # (in_dim, hid_p)
        "b1": pad_b(params["b1"], hid_p),
        "w2": pad_w(params["w2"].T, hid_p, hid_p),
        "b2": pad_b(params["b2"], hid_p),
        "w3": pad_w(params["w3"].T, hid_p, out_p),
        "b3": pad_b(params["b3"], out_p, fill=NEG_BIG),
        "dims": (in_dim, hid_dim, out_dim, hid_p, out_p),
    }


@functools.partial(jax.jit, static_argnames=("dims", "block_batch"))
def _forward_impl(x, w1, b1, w2, b2, w3, b3, *, dims, block_batch):
    in_dim, hid_dim, out_dim, hid_p, out_p = dims
    B = x.shape[0]

    # Pad batch only to a 16-row boundary (bounded waste, bf16 output tiles).
    b_pad = _round_up(max(B, TB_ALIGN), TB_ALIGN)
    if b_pad != B:
        xp = jnp.zeros((b_pad, in_dim), x.dtype).at[:B, :].set(x)
    else:
        xp = x

    # Batch tile: large (default 512) to approach the HBM roofline and
    # amortize per-grid-step overhead; capped so v7x gets >=2 grid steps
    # (both TensorCores busy) whenever the batch spans >=2 minimal tiles.
    tb = max(TB_ALIGN, min(block_batch, b_pad))
    if b_pad >= 2 * TB_ALIGN:
        tb = min(tb, _round_up(pl.cdiv(b_pad, 2), TB_ALIGN))
    grid = (pl.cdiv(b_pad, tb),)

    flops = 2 * b_pad * (in_dim * hid_p + hid_p * hid_p + hid_p * out_p)
    transcendentals = b_pad * out_p  # exp
    bytes_accessed = (
        xp.size * 4                                    # f32 input, un-padded
        + (w1.size + w2.size + w3.size) * 2            # bf16 resident weights
        + (b1.size + b2.size + b3.size) * 4            # f32 biases
        + b_pad * out_p * 2                            # bf16 output
    )

    out = pl.pallas_call(
        decision_net_kernel,
        out_shape=jax.ShapeDtypeStruct((b_pad, out_p), jnp.bfloat16),
        grid=grid,
        in_specs=[
            pl.BlockSpec((tb, in_dim), lambda i: (i, 0)),      # x: batch-tiled
            pl.BlockSpec((in_dim, hid_p), lambda i: (0, 0)),   # w1: VMEM-resident
            pl.BlockSpec((1, hid_p), lambda i: (0, 0)),        # b1
            pl.BlockSpec((hid_p, hid_p), lambda i: (0, 0)),    # w2
            pl.BlockSpec((1, hid_p), lambda i: (0, 0)),        # b2
            pl.BlockSpec((hid_p, out_p), lambda i: (0, 0)),    # w3
            pl.BlockSpec((1, out_p), lambda i: (0, 0)),        # b3
        ],
        out_specs=pl.BlockSpec((tb, out_p), lambda i: (i, 0)),
        compiler_params=pltpu.CompilerParams(
            dimension_semantics=("parallel",)),
        cost_estimate=pl.CostEstimate(
            flops=flops,
            transcendentals=transcendentals,
            bytes_accessed=bytes_accessed),
    )(xp, w1, b1, w2, b2, w3, b3)

    # Drop batch padding and the lane-padded logit columns (exactly 0), then
    # upcast the tiny sliced result to f32 for API parity with the PyTorch ref.
    return out[:B, :out_dim].astype(jnp.float32)


def decision_net_forward(x, prepped, *, block_batch=512):
    """x: [B, input_dim] float32. prepped: output of prepare_params()."""
    return _forward_impl(
        x, prepped["w1"], prepped["b1"], prepped["w2"], prepped["b2"],
        prepped["w3"], prepped["b3"],
        dims=prepped["dims"], block_batch=block_batch)


def init_params(key, input_dim, hidden_dim, output_dim):
    """Deterministic synthetic init, PyTorch Linear layout ([out, in])."""
    ks = jax.random.split(key, 6)

    def lin(kw, kb, fan_in, fan_out):
        bound = 1.0 / jnp.sqrt(fan_in)
        w = jax.random.uniform(kw, (fan_out, fan_in), jnp.float32, -bound, bound)
        b = jax.random.uniform(kb, (fan_out,), jnp.float32, -bound, bound)
        return w, b

    w1, b1 = lin(ks[0], ks[1], input_dim, hidden_dim)
    w2, b2 = lin(ks[2], ks[3], hidden_dim, hidden_dim)
    w3, b3 = lin(ks[4], ks[5], hidden_dim, output_dim)
    return {"w1": w1, "b1": b1, "w2": w2, "b2": b2, "w3": w3, "b3": b3}


def reference_forward(x, params):
    h1 = jnp.maximum(x @ params["w1"].T + params["b1"], 0.0)
    h2 = jnp.maximum(h1 @ params["w2"].T + params["b2"], 0.0)
    logits = h2 @ params["w3"].T + params["b3"]
    return jax.nn.softmax(logits, axis=1)


if __name__ == "__main__":
    key = jax.random.PRNGKey(0)
    k_x, k_p = jax.random.split(key)

    batch, input_dim, hidden_dim, output_dim = 8, 16, 32, 8

    x = jax.random.normal(k_x, (batch, input_dim), dtype=jnp.float32)
    params = init_params(k_p, input_dim, hidden_dim, output_dim)

    prepped = prepare_params(params)  # one-time: transpose + pad + bf16 cast

    out = decision_net_forward(x, prepped)
    out = jax.block_until_ready(out)

    ref = reference_forward(x, params)
    assert out.shape == (batch, output_dim)
    assert bool(jnp.all(jnp.isfinite(out)))
    # bf16 matmul operands / activations and bf16 output store -> loosened
    # tolerance vs the f32 reference (intentional precision/perf tradeoff).
    assert jnp.allclose(out, ref, atol=2e-2, rtol=2e-2), float(
        jnp.max(jnp.abs(out - ref)))
    # Exact softmax divide in-kernel; residual row-sum error is only the bf16
    # output quantization (<~0.5%).
    assert jnp.allclose(jnp.sum(out, axis=1), 1.0, atol=1e-2)

    print("KERNEL_OK")
</pallas_src>

<mosaic_0001>
module attributes {stable_mosaic.version = 11 : i64} {
  func.func @decision_net_kernel(%arg0: i32, %arg1: memref<16x16xf32, #tpu.memory_space<vmem>>, %arg2: memref<16x128xbf16, #tpu.memory_space<vmem>>, %arg3: memref<1x128xf32, #tpu.memory_space<vmem>>, %arg4: memref<128x128xbf16, #tpu.memory_space<vmem>>, %arg5: memref<1x128xf32, #tpu.memory_space<vmem>>, %arg6: memref<128x128xbf16, #tpu.memory_space<vmem>>, %arg7: memref<1x128xf32, #tpu.memory_space<vmem>>, %arg8: memref<16x128xbf16, #tpu.memory_space<vmem>>) attributes {dimension_semantics = [#tpu.dimension_semantics<parallel>], iteration_bounds = array<i64: 1>, scalar_prefetch = 0 : i64, scratch_operands = 0 : i64, tpu.core_type = #tpu.core_type<tc>, window_params = [{transform_indices = @transform_0, window_bounds = array<i64: 16, 16>}, {pipeline_mode = #tpu.pipeline_mode<synchronous>, transform_indices = @transform_1, window_bounds = array<i64: 16, 128>}, {pipeline_mode = #tpu.pipeline_mode<synchronous>, transform_indices = @transform_2, window_bounds = array<i64: 1, 128>}, {pipeline_mode = #tpu.pipeline_mode<synchronous>, transform_indices = @transform_3, window_bounds = array<i64: 128, 128>}, {pipeline_mode = #tpu.pipeline_mode<synchronous>, transform_indices = @transform_4, window_bounds = array<i64: 1, 128>}, {pipeline_mode = #tpu.pipeline_mode<synchronous>, transform_indices = @transform_5, window_bounds = array<i64: 128, 128>}, {pipeline_mode = #tpu.pipeline_mode<synchronous>, transform_indices = @transform_6, window_bounds = array<i64: 1, 128>}, {transform_indices = @transform_7, window_bounds = array<i64: 16, 128>}]} {
    %c0 = arith.constant 0 : index
    %c0_0 = arith.constant 0 : index
    %0 = vector.load %arg1[%c0, %c0_0] : memref<16x16xf32, #tpu.memory_space<vmem>>, vector<16x16xf32>
    %1 = arith.truncf %0 : vector<16x16xf32> to vector<16x16xbf16>
    %c0_1 = arith.constant 0 : index
    %c0_2 = arith.constant 0 : index
    %2 = vector.load %arg2[%c0_1, %c0_2] : memref<16x128xbf16, #tpu.memory_space<vmem>>, vector<16x128xbf16>
    %cst = arith.constant dense<0.000000e+00> : vector<16x128xf32>
    %3 = tpu.matmul %1, %2, %cst {dimension_numbers = #tpu.dot_dimension_numbers<[1], [0], [0], [1], [0, 0, 1, 1], [], []>} : vector<16x16xbf16>, vector<16x128xbf16>, vector<16x128xf32> -> vector<16x128xf32>
    %c0_3 = arith.constant 0 : index
    %c0_4 = arith.constant 0 : index
    %4 = vector.load %arg3[%c0_3, %c0_4] : memref<1x128xf32, #tpu.memory_space<vmem>>, vector<1x128xf32>
    %5 = vector.broadcast %4 : vector<1x128xf32> to vector<16x128xf32>
    %6 = arith.addf %3, %5 : vector<16x128xf32>
    %cst_5 = arith.constant 0.000000e+00 : f32
    %7 = vector.broadcast %cst_5 : f32 to vector<16x128xf32>
    %8 = arith.maximumf %6, %7 : vector<16x128xf32>
    %9 = arith.truncf %8 : vector<16x128xf32> to vector<16x128xbf16>
    %c0_6 = arith.constant 0 : index
    %c0_7 = arith.constant 0 : index
    %10 = vector.load %arg4[%c0_6, %c0_7] : memref<128x128xbf16, #tpu.memory_space<vmem>>, vector<128x128xbf16>
    %cst_8 = arith.constant dense<0.000000e+00> : vector<16x128xf32>
    %11 = tpu.matmul %9, %10, %cst_8 {dimension_numbers = #tpu.dot_dimension_numbers<[1], [0], [0], [1], [0, 0, 1, 1], [], []>} : vector<16x128xbf16>, vector<128x128xbf16>, vector<16x128xf32> -> vector<16x128xf32>
    %c0_9 = arith.constant 0 : index
    %c0_10 = arith.constant 0 : index
    %12 = vector.load %arg5[%c0_9, %c0_10] : memref<1x128xf32, #tpu.memory_space<vmem>>, vector<1x128xf32>
    %13 = vector.broadcast %12 : vector<1x128xf32> to vector<16x128xf32>
    %14 = arith.addf %11, %13 : vector<16x128xf32>
    %cst_11 = arith.constant 0.000000e+00 : f32
    %15 = vector.broadcast %cst_11 : f32 to vector<16x128xf32>
    %16 = arith.maximumf %14, %15 : vector<16x128xf32>
    %17 = arith.truncf %16 : vector<16x128xf32> to vector<16x128xbf16>
    %c0_12 = arith.constant 0 : index
    %c0_13 = arith.constant 0 : index
    %18 = vector.load %arg6[%c0_12, %c0_13] : memref<128x128xbf16, #tpu.memory_space<vmem>>, vector<128x128xbf16>
    %cst_14 = arith.constant dense<0.000000e+00> : vector<16x128xf32>
    %19 = tpu.matmul %17, %18, %cst_14 {dimension_numbers = #tpu.dot_dimension_numbers<[1], [0], [0], [1], [0, 0, 1, 1], [], []>} : vector<16x128xbf16>, vector<128x128xbf16>, vector<16x128xf32> -> vector<16x128xf32>
    %c0_15 = arith.constant 0 : index
    %c0_16 = arith.constant 0 : index
    %20 = vector.load %arg7[%c0_15, %c0_16] : memref<1x128xf32, #tpu.memory_space<vmem>>, vector<1x128xf32>
    %21 = vector.broadcast %20 : vector<1x128xf32> to vector<16x128xf32>
    %22 = arith.addf %19, %21 : vector<16x128xf32>
    %cst_17 = arith.constant dense<0xFF800000> : vector<16xf32>
    %23 = vector.multi_reduction <maximumf>, %22, %cst_17 [1] : vector<16x128xf32> to vector<16xf32>
    %24 = vector.shape_cast %23 : vector<16xf32> to vector<16x1xf32>
    %25 = vector.broadcast %24 : vector<16x1xf32> to vector<16x128xf32>
    %26 = arith.subf %22, %25 : vector<16x128xf32>
    %27 = math.exp %26 : vector<16x128xf32>
    %cst_18 = arith.constant dense<0.000000e+00> : vector<16xf32>
    %28 = vector.multi_reduction <add>, %27, %cst_18 [1] : vector<16x128xf32> to vector<16xf32>
    %29 = vector.shape_cast %28 : vector<16xf32> to vector<16x1xf32>
    %30 = vector.broadcast %29 : vector<16x1xf32> to vector<16x128xf32>
    %31 = arith.divf %27, %30 : vector<16x128xf32>
    %32 = arith.truncf %31 : vector<16x128xf32> to vector<16x128xbf16>
    %c0_19 = arith.constant 0 : index
    %c0_20 = arith.constant 0 : index
    %33 = vector.load %arg8[%c0_19, %c0_20] : memref<16x128xbf16, #tpu.memory_space<vmem>>, vector<16x128xbf16>
    tpu.vector_store %arg8[%c0_19, %c0_20], %32 {strides = array<i32>} : memref<16x128xbf16, #tpu.memory_space<vmem>>, vector<16x128xbf16>,
    return
  }
  func.func @transform_0(%arg0: i32) -> (i32, i32) {
    %c0_i32 = arith.constant 0 : i32
    %c0_i32_0 = arith.constant 0 : i32
    return %arg0, %c0_i32 : i32, i32
  }
  func.func @transform_1(%arg0: i32) -> (i32, i32) {
    %c0_i32 = arith.constant 0 : i32
    %c0_i32_0 = arith.constant 0 : i32
    %c0_i32_1 = arith.constant 0 : i32
    return %c0_i32, %c0_i32_0 : i32, i32
  }
  func.func @transform_2(%arg0: i32) -> (i32, i32) {
    %c0_i32 = arith.constant 0 : i32
    %c0_i32_0 = arith.constant 0 : i32
    %c0_i32_1 = arith.constant 0 : i32
    return %c0_i32, %c0_i32_0 : i32, i32
  }
  func.func @transform_3(%arg0: i32) -> (i32, i32) {
    %c0_i32 = arith.constant 0 : i32
    %c0_i32_0 = arith.constant 0 : i32
    %c0_i32_1 = arith.constant 0 : i32
    return %c0_i32, %c0_i32_0 : i32, i32
  }
  func.func @transform_4(%arg0: i32) -> (i32, i32) {
    %c0_i32 = arith.constant 0 : i32
    %c0_i32_0 = arith.constant 0 : i32
    %c0_i32_1 = arith.constant 0 : i32
    return %c0_i32, %c0_i32_0 : i32, i32
  }
  func.func @transform_5(%arg0: i32) -> (i32, i32) {
    %c0_i32 = arith.constant 0 : i32
    %c0_i32_0 = arith.constant 0 : i32
    %c0_i32_1 = arith.constant 0 : i32
    return %c0_i32, %c0_i32_0 : i32, i32
  }
  func.func @transform_6(%arg0: i32) -> (i32, i32) {
    %c0_i32 = arith.constant 0 : i32
    %c0_i32_0 = arith.constant 0 : i32
    %c0_i32_1 = arith.constant 0 : i32
    return %c0_i32, %c0_i32_0 : i32, i32
  }
  func.func @transform_7(%arg0: i32) -> (i32, i32) {
    %c0_i32 = arith.constant 0 : i32
    %c0_i32_0 = arith.constant 0 : i32
    return %arg0, %c0_i32 : i32, i32
  }
}

</mosaic_0001>

<llo_original>
// kernel: _forward_impl.1
$region0: #{_forward_impl.1}
  #allocation0 [shape = 'u32[]', space=smem, size = 0x4, offset = 0x4, fixed_abs, tag = 'smem constant byte address 0x4 - core index']
  #allocation1 [shape = 'u32[144,128]{1,0:T(1,128)}', space=vmem, size = 0x12000, scoped, tag = 'internal scratch']
  %s0 = inlined_call_operand.vmem [shape: f32[16,16], index: 0, kind: input, shape index: {}]
  %s1 = inlined_call_operand.vmem [shape: bf16[16,128], index: 1, kind: input, shape index: {}]
  %s2 = inlined_call_operand.vmem [shape: f32[1,128], index: 2, kind: input, shape index: {}]
  %s3 = inlined_call_operand.hbm [shape: bf16[128,128], index: 3, kind: input, shape index: {}]
  %s4 = inlined_call_operand.vmem [shape: f32[1,128], index: 4, kind: input, shape index: {}]
  %s5 = inlined_call_operand.hbm [shape: bf16[128,128], index: 5, kind: input, shape index: {}]
  %s6 = inlined_call_operand.vmem [shape: f32[1,128], index: 6, kind: input, shape index: {}]
  %s7 = inlined_call_operand.vmem [shape: bf16[16,128], index: 7, kind: output, shape index: {}]
  %s8 = sld [smem:[#allocation0]]
  $region46: #{_forward_impl.1} parent=0
    _
  %s10 = ssub.s32 1, %s8
  %s11 = scalar_select 0, %s10, %s8
  $region1: #{_forward_impl.1} parent=0
    #allocation2 [shape = 'u8[32768]{0}', space=vmem, size = 0x8000, scoped, tag = 'input window, operand 3, single buffered']
    #allocation3 [shape = 's32[1]{0}', space=sflag, size = 0x4, scoped, tag = 'scoped memory for _forward_impl.1']
    #allocation4 [shape = 'u8[32768]{0}', space=vmem, size = 0x8000, scoped, tag = 'input window, operand 5, single buffered']
    #allocation5 [shape = 's32[1]{0}', space=sflag, size = 0x4, scoped, tag = 'scoped memory for _forward_impl.1']
    %12 = vsyncpa [#allocation3], 0
    %13 = vsyncpa [#allocation5], 0
    // Predicated region
    $region2: #{_forward_impl.1} parent=1 // pred_check
      _
    $region3: #{_forward_impl.1} parent=1 // pred_check_branch
      %15 = sbr.rel (0) target = $region5
    $region4: #{_forward_impl.1} parent=1 // pred_region
      _
    $region5: #{_forward_impl.1} parent=1 // pred_fallthru
      _
    // Predicated region
    $region6: #{_forward_impl.1} parent=1 // pred_check
      _
    $region7: #{_forward_impl.1} parent=1 // pred_check_branch
      %17 = sbr.rel (0) target = $region9
    $region8: #{_forward_impl.1} parent=1 // pred_region
      _
    $region9: #{_forward_impl.1} parent=1 // pred_fallthru
      _
    // Predicated region
    $region10: #{_forward_impl.1} parent=1 // pred_check
      _
    $region11: #{_forward_impl.1} parent=1 // pred_check_branch
      %19 = sbr.rel (0) target = $region13
    $region12: #{_forward_impl.1} parent=1 // pred_region
      _
    $region13: #{_forward_impl.1} parent=1 // pred_fallthru
      _
    // Predicated region
    $region14: #{_forward_impl.1} parent=1 // pred_check
      _
    $region15: #{_forward_impl.1} parent=1 // pred_check_branch
      %21 = sbr.rel (0) target = $region17
    $region16: #{_forward_impl.1} parent=1 // pred_region
      %s23 = ssub.s32 1024, 1024
      %24 = vsyncadd [#allocation3], %s23
      %s25 = sshll.u32 [#allocation2], 4
      %s26 = int_to_ptr.vmem [resolvable:$true] %s25
      %31 = dma.hbm_to_vmem [thread:$0]  %s3, 1024, %s26, [#allocation3], 64, 64, 4
    $region17: #{_forward_impl.1} parent=1 // pred_fallthru
      _
    // Predicated region
    $region18: #{_forward_impl.1} parent=1 // pred_check
      _
    $region19: #{_forward_impl.1} parent=1 // pred_check_branch
      %33 = sbr.rel (0) target = $region21
    $region20: #{_forward_impl.1} parent=1 // pred_region
      _
    $region21: #{_forward_impl.1} parent=1 // pred_fallthru
      _
    // Predicated region
    $region22: #{_forward_impl.1} parent=1 // pred_check
      _
    $region23: #{_forward_impl.1} parent=1 // pred_check_branch
      %35 = sbr.rel (0) target = $region25
    $region24: #{_forward_impl.1} parent=1 // pred_region
      %s37 = ssub.s32 1024, 1024
      %38 = vsyncadd [#allocation5], %s37
      %s39 = sshll.u32 [#allocation4], 4
      %s40 = int_to_ptr.vmem [resolvable:$true] %s39
      %45 = dma.hbm_to_vmem [thread:$0]  %s5, 1024, %s40, [#allocation5], 64, 64, 4
    $region25: #{_forward_impl.1} parent=1 // pred_fallthru
      _
    // Predicated region
    $region26: #{_forward_impl.1} parent=1 // pred_check
      _
    $region27: #{_forward_impl.1} parent=1 // pred_check_branch
      %47 = sbr.rel (0) target = $region29
    $region28: #{_forward_impl.1} parent=1 // pred_region
      _
    $region29: #{_forward_impl.1} parent=1 // pred_fallthru
      _
    // Predicated region
    $region30: #{_forward_impl.1} parent=1 // pred_check
      _
    $region31: #{_forward_impl.1} parent=1 // pred_check_branch
      %49 = sbr.rel (0) target = $region33
    $region32: #{_forward_impl.1} parent=1 // pred_region
      %50 = dma.done [#allocation3], 1024
    $region33: #{_forward_impl.1} parent=1 // pred_fallthru
      _
    // Predicated region
    $region34: #{_forward_impl.1} parent=1 // pred_check
      _
    $region35: #{_forward_impl.1} parent=1 // pred_check_branch
      %52 = sbr.rel (0) target = $region37
    $region36: #{_forward_impl.1} parent=1 // pred_region
      %53 = dma.done [#allocation5], 1024
    $region37: #{_forward_impl.1} parent=1 // pred_fallthru
      _
    %v55 = vld [vmem:[%s0] sm:$0xff]
    %v56 = vld [vmem:[%s0 + $0x8] sm:$0xff]
    %v57 = vpack.c.bf16 %v56, %v55
    %v58 = vld [vmem:[%s1] sm:$0xf]
    %v59 = vld [vmem:[%s1 + $0x4] sm:$0xf]
    %v60 = vld [vmem:[%s2] sm:$0x1]
    %v62 = vlaneseq
    %v63 = vshrl.u32 %v62, 7
    %v64 = vsub.s32 0, %v63
    %v65 = vrot.slane %v60, %v64
    %v69 = vunpack.c.l.b16 %v58
    %v70 = vunpack.c.l.b16 %v59
    %v71 = vpack.c.b16 %v70, %v69
    %vm73 = vcmask 130048
    %v75 = vsel %vm73, %v57, 0
    %77 = vmatprep.subr.bf16.mxu0 0
    %78 = vmatpush1.bf16.msra.mxu0 0
    %79 = vmatprep.subr.bf16.mxu0 0
    %80 = vmatpush1.bf16.msra.mxu0 0
    %81 = vmatprep.subr.bf16.mxu0 0
    %82 = vmatpush1.bf16.msra.mxu0 0
    %83 = vmatprep.subr.bf16.mxu0 0
    %84 = vmatpush1.bf16.msra.mxu0 0
    %85 = vmatprep.subr.bf16.mxu0 0
    %86 = vmatpush1.bf16.msra.mxu0 0
    %87 = vmatprep.subr.bf16.mxu0 0
    %88 = vmatpush1.bf16.msra.mxu0 0
    %89 = vmatprep.subr.bf16.mxu0 0
    %90 = vmatpush1.bf16.msra.mxu0 0
    %91 = vmatprep.subr.bf16.mxu0 0
    %92 = vmatpush1.bf16.msra.mxu0 %v71
    %93 = vmatprep.subr.bf16.mxu0 0
    %94 = vmatpush2.bf16.msra.mxu0 0
    %95 = vmatprep.subr.bf16.mxu0 0
    %96 = vmatpush2.bf16.msra.mxu0 0
    %97 = vmatprep.subr.bf16.mxu0 0
    %98 = vmatpush2.bf16.msra.mxu0 0
    %99 = vmatprep.subr.bf16.mxu0 0
    %100 = vmatpush2.bf16.msra.mxu0 0
    %101 = vmatprep.subr.bf16.mxu0 0
    %102 = vmatpush2.bf16.msra.mxu0 0
    %103 = vmatprep.subr.bf16.mxu0 0
    %104 = vmatpush2.bf16.msra.mxu0 0
    %105 = vmatprep.subr.bf16.mxu0 0
    %106 = vmatpush2.bf16.msra.mxu0 0
    %107 = vmatprep.subr.bf16.mxu0 0
    %108 = vmatpush2.bf16.msra.mxu0 0
    %109 = vmatprep.mubr.bf16.mxu0 0
    %110 = vmatmul.mubr.bf16.gmra.mxu0 %v75
    %v111 = vpop.f32.mrf.mxu0
    %v112 = vadd.f32 %v65, %v111
    %v113 = vpop.f32.mrf.mxu0
    %v114 = vpop.f32.mrf.mxu0
    %v115 = vadd.f32 %v65, %v114
    %v116 = vpop.f32.mrf.mxu0
    %117 = vdwg.mxu0
    %v118 = vmax.f32 %v112, 0.0
    %v119 = vmax.f32 %v115, 0.0
    %v120 = vpack.c.bf16 %v119, %v118
    %v121 = vld [vmem:[#allocation2] sm:$0xf]
    %v122 = vld [vmem:[#allocation2 + $0x4] sm:$0xf]
    %v123 = vld [vmem:[#allocation2 + $0x8] sm:$0xf]
    %v124 = vld [vmem:[#allocation2 + $0xc] sm:$0xf]
    %v125 = vld [vmem:[#allocation2 + $0x10] sm:$0xf]
    %v126 = vld [vmem:[#allocation2 + $0x14] sm:$0xf]
    %v127 = vld [vmem:[#allocation2 + $0x18] sm:$0xf]
    %v128 = vld [vmem:[#allocation2 + $0x1c] sm:$0xf]
    %v129 = vld [vmem:[#allocation2 + $0x20] sm:$0xf]
    %v130 = vld [vmem:[#allocation2 + $0x24] sm:$0xf]
    %v131 = vld [vmem:[#allocation2 + $0x28] sm:$0xf]
    %v132 = vld [vmem:[#allocation2 + $0x2c] sm:$0xf]
    %v133 = vld [vmem:[#allocation2 + $0x30] sm:$0xf]
    %v134 = vld [vmem:[#allocation2 + $0x34] sm:$0xf]
    %v135 = vld [vmem:[#allocation2 + $0x38] sm:$0xf]
    %v136 = vld [vmem:[#allocation2 + $0x3c] sm:$0xf]
    %v137 = vld [vmem:[%s4] sm:$0x1]
    %v139 = vlaneseq
    %v140 = vshrl.u32 %v139, 7
    %v141 = vsub.s32 0, %v140
    %v142 = vrot.slane %v137, %v141
    %v160 = vunpack.c.l.b16 %v121
    %v161 = vunpack.c.l.b16 %v122
    %v162 = vunpack.c.l.b16 %v123
    %v163 = vunpack.c.l.b16 %v124
    %v164 = vunpack.c.l.b16 %v125
    %v165 = vunpack.c.l.b16 %v126
    %v166 = vunpack.c.l.b16 %v127
    %v167 = vunpack.c.l.b16 %v128
    %v168 = vunpack.c.l.b16 %v129
    %v169 = vunpack.c.l.b16 %v130
    %v170 = vunpack.c.l.b16 %v131
    %v171 = vunpack.c.l.b16 %v132
    %v172 = vunpack.c.l.b16 %v133
    %v173 = vunpack.c.l.b16 %v134
    %v174 = vunpack.c.l.b16 %v135
    %v175 = vunpack.c.l.b16 %v136
    %v176 = vpack.c.b16 %v161, %v160
    %v177 = vpack.c.b16 %v163, %v162
    %v178 = vpack.c.b16 %v165, %v164
    %v179 = vpack.c.b16 %v167, %v166
    %v180 = vpack.c.b16 %v169, %v168
    %v181 = vpack.c.b16 %v171, %v170
    %v182 = vpack.c.b16 %v173, %v172
    %v183 = vpack.c.b16 %v175, %v174
    %192 = vmatprep.subr.bf16.mxu0 0
    %193 = vmatpush1.bf16.msra.mxu0 %v183
    %194 = vmatprep.subr.bf16.mxu0 0
    %195 = vmatpush1.bf16.msra.mxu0 %v182
    %196 = vmatprep.subr.bf16.mxu0 0
    %197 = vmatpush1.bf16.msra.mxu0 %v181
    %198 = vmatprep.subr.bf16.mxu0 0
    %199 = vmatpush1.bf16.msra.mxu0 %v180
    %200 = vmatprep.subr.bf16.mxu0 0
    %201 = vmatpush1.bf16.msra.mxu0 %v179
    %202 = vmatprep.subr.bf16.mxu0 0
    %203 = vmatpush1.bf16.msra.mxu0 %v178
    %204 = vmatprep.subr.bf16.mxu0 0
    %205 = vmatpush1.bf16.msra.mxu0 %v177
    %206 = vmatprep.subr.bf16.mxu0 0
    %207 = vmatpush1.bf16.msra.mxu0 %v176
    %208 = vmatprep.subr.bf16.mxu0 0
    %209 = vmatpush2.bf16.msra.mxu0 0
    %210 = vmatprep.subr.bf16.mxu0 0
    %211 = vmatpush2.bf16.msra.mxu0 0
    %212 = vmatprep.subr.bf16.mxu0 0
    %213 = vmatpush2.bf16.msra.mxu0 0
    %214 = vmatprep.subr.bf16.mxu0 0
    %215 = vmatpush2.bf16.msra.mxu0 0
    %216 = vmatprep.subr.bf16.mxu0 0
    %217 = vmatpush2.bf16.msra.mxu0 0
    %218 = vmatprep.subr.bf16.mxu0 0
    %219 = vmatpush2.bf16.msra.mxu0 0
    %220 = vmatprep.subr.bf16.mxu0 0
    %221 = vmatpush2.bf16.msra.mxu0 0
    %222 = vmatprep.subr.bf16.mxu0 0
    %223 = vmatpush2.bf16.msra.mxu0 0
    %224 = vmatprep.mubr.bf16.mxu0 0
    %225 = vmatmul.mubr.bf16.gmra.mxu0 %v120
    %v226 = vpop.f32.mrf.mxu0
    %v227 = vadd.f32 %v142, %v226
    %v228 = vpop.f32.mrf.mxu0
    %v229 = vpop.f32.mrf.mxu0
    %v230 = vadd.f32 %v142, %v229
    %v231 = vpop.f32.mrf.mxu0
    %232 = vdwg.mxu0
    %v233 = vmax.f32 %v227, 0.0
    %v234 = vmax.f32 %v230, 0.0
    %v235 = vpack.c.bf16 %v234, %v233
    %v236 = vld [vmem:[#allocation4] sm:$0xf]
    %v237 = vld [vmem:[#allocation4 + $0x4] sm:$0xf]
    %v238 = vld [vmem:[#allocation4 + $0x8] sm:$0xf]
    %v239 = vld [vmem:[#allocation4 + $0xc] sm:$0xf]
    %v240 = vld [vmem:[#allocation4 + $0x10] sm:$0xf]
    %v241 = vld [vmem:[#allocation4 + $0x14] sm:$0xf]
    %v242 = vld [vmem:[#allocation4 + $0x18] sm:$0xf]
    %v243 = vld [vmem:[#allocation4 + $0x1c] sm:$0xf]
    %v244 = vld [vmem:[#allocation4 + $0x20] sm:$0xf]
    %v245 = vld [vmem:[#allocation4 + $0x24] sm:$0xf]
    %v246 = vld [vmem:[#allocation4 + $0x28] sm:$0xf]
    %v247 = vld [vmem:[#allocation4 + $0x2c] sm:$0xf]
    %v248 = vld [vmem:[#allocation4 + $0x30] sm:$0xf]
    %v249 = vld [vmem:[#allocation4 + $0x34] sm:$0xf]
    %v250 = vld [vmem:[#allocation4 + $0x38] sm:$0xf]
    %v251 = vld [vmem:[#allocation4 + $0x3c] sm:$0xf]
    %v252 = vld [vmem:[%s6] sm:$0x1]
    %v254 = vlaneseq
    %v255 = vshrl.u32 %v254, 7
    %v256 = vsub.s32 0, %v255
    %v257 = vrot.slane %v252, %v256
    %v275 = vunpack.c.l.b16 %v236
    %v276 = vunpack.c.l.b16 %v237
    %v277 = vunpack.c.l.b16 %v238
    %v278 = vunpack.c.l.b16 %v239
    %v279 = vunpack.c.l.b16 %v240
    %v280 = vunpack.c.l.b16 %v241
    %v281 = vunpack.c.l.b16 %v242
    %v282 = vunpack.c.l.b16 %v243
    %v283 = vunpack.c.l.b16 %v244
    %v284 = vunpack.c.l.b16 %v245
    %v285 = vunpack.c.l.b16 %v246
    %v286 = vunpack.c.l.b16 %v247
    %v287 = vunpack.c.l.b16 %v248
    %v288 = vunpack.c.l.b16 %v249
    %v289 = vunpack.c.l.b16 %v250
    %v290 = vunpack.c.l.b16 %v251
    %v291 = vpack.c.b16 %v276, %v275
    %v292 = vpack.c.b16 %v278, %v277
    %v293 = vpack.c.b16 %v280, %v279
    %v294 = vpack.c.b16 %v282, %v281
    %v295 = vpack.c.b16 %v284, %v283
    %v296 = vpack.c.b16 %v286, %v285
    %v297 = vpack.c.b16 %v288, %v287
    %v298 = vpack.c.b16 %v290, %v289
    %307 = vmatprep.subr.bf16.mxu0 0
    %308 = vmatpush1.bf16.msra.mxu0 %v298
    %309 = vmatprep.subr.bf16.mxu0 0
    %310 = vmatpush1.bf16.msra.mxu0 %v297
    %311 = vmatprep.subr.bf16.mxu0 0
    %312 = vmatpush1.bf16.msra.mxu0 %v296
    %313 = vmatprep.subr.bf16.mxu0 0
    %314 = vmatpush1.bf16.msra.mxu0 %v295
    %315 = vmatprep.subr.bf16.mxu0 0
    %316 = vmatpush1.bf16.msra.mxu0 %v294
    %317 = vmatprep.subr.bf16.mxu0 0
    %318 = vmatpush1.bf16.msra.mxu0 %v293
    %319 = vmatprep.subr.bf16.mxu0 0
    %320 = vmatpush1.bf16.msra.mxu0 %v292
    %321 = vmatprep.subr.bf16.mxu0 0
    %322 = vmatpush1.bf16.msra.mxu0 %v291
    %323 = vmatprep.subr.bf16.mxu0 0
    %324 = vmatpush2.bf16.msra.mxu0 0
    %325 = vmatprep.subr.bf16.mxu0 0
    %326 = vmatpush2.bf16.msra.mxu0 0
    %327 = vmatprep.subr.bf16.mxu0 0
    %328 = vmatpush2.bf16.msra.mxu0 0
    %329 = vmatprep.subr.bf16.mxu0 0
    %330 = vmatpush2.bf16.msra.mxu0 0
    %331 = vmatprep.subr.bf16.mxu0 0
    %332 = vmatpush2.bf16.msra.mxu0 0
    %333 = vmatprep.subr.bf16.mxu0 0
    %334 = vmatpush2.bf16.msra.mxu0 0
    %335 = vmatprep.subr.bf16.mxu0 0
    %336 = vmatpush2.bf16.msra.mxu0 0
    %337 = vmatprep.subr.bf16.mxu0 0
    %338 = vmatpush2.bf16.msra.mxu0 0
    %339 = vmatprep.mubr.bf16.mxu0 0
    %340 = vmatmul.mubr.bf16.gmra.mxu0 %v235
    %v341 = vpop.f32.mrf.mxu0
    %v342 = vadd.f32 %v257, %v341
    %v343 = vpop.f32.mrf.mxu0
    %v344 = vpop.f32.mrf.mxu0
    %v345 = vadd.f32 %v257, %v344
    %v346 = vpop.f32.mrf.mxu0
    %347 = vdwg.mxu0
    %348 = vmax.xlane.f32.xlu0 %v342
    %v349 = vpop.xlane.xlu0 %348
    %350 = vmax.xlane.f32.xlu0 %v345
    %v351 = vpop.xlane.xlu0 %350
    %v352 = vsub.f32 %v342, %v349
    %v353 = vsub.f32 %v345, %v351
    %v354 = vmul.f32 %v352, 1.442695
    %v355 = vpow.pop %v354
    %v356 = vmul.f32 %v353, 1.442695
    %v357 = vpow.pop %v356
    %358 = vadd.xlane.f32.xlu0 %v355
    %v359 = vpop.xlane.xlu0 %358
    %360 = vadd.xlane.f32.xlu0 %v357
    %v361 = vpop.xlane.xlu0 %360
    %v362 = vrcp.pop %v359
    %v363 = vmul.f32 %v355, %v362
    %v364 = vrcp.pop %v361
    %v365 = vmul.f32 %v357, %v364
    %v366 = vpack.c.bf16 %v365, %v363
    %v368 = vunpack.c.l.b16 %v366
    %v369 = vunpack.c.h.b16 %v366
    %v370 = vpack.c.b16 %v368, %v368
    %v371 = vpack.c.b16 %v369, %v369
    %374 = vst [vmem:[%s7] sm:$0xf] %v370
    %375 = vst [vmem:[%s7 + $0x4] sm:$0xf] %v371
    // Predicated region
    $region38: #{_forward_impl.1} parent=1 // pred_check
      _
    $region39: #{_forward_impl.1} parent=1 // pred_check_branch
      %377 = sbr.rel (0) target = $region41
    $region40: #{_forward_impl.1} parent=1 // pred_region
      _
    $region41: #{_forward_impl.1} parent=1 // pred_fallthru
      _
    // Predicated region
    $region42: #{_forward_impl.1} parent=1 // pred_check
      _
    $region43: #{_forward_impl.1} parent=1 // pred_check_branch
      %379 = sbr.rel (0) target = $region45
    $region44: #{_forward_impl.1} parent=1 // pred_region
      _
    $region45: #{_forward_impl.1} parent=1 // pred_fallthru
      _
    %380 = vsyncpa [#allocation3], 1
    %381 = vsyncpa [#allocation5], 1

</llo_original>
